<compile_context>
chip_gen: v7x
topology: tpu7x:2x2x1
jax: 0.10.0
libtpu: 0.0.40
codegen_flags: <defaults>
</compile_context>

<pallas_src>
import functools

import jax
import jax.numpy as jnp
from jax import lax
from jax.experimental import pallas as pl
from jax.experimental.pallas import tpu as pltpu


def _spatial_attn_kernel(w_ref, x_ref, o_ref, sum_acc, max_acc, *, H, W, C):
    """One (batch-slab, channel-chunk) grid step.

    w_ref   : SMEM (18,) f32      conv weight, [in_ch, kh, kw] flattened
    x_ref   : VMEM (NB, CB, HW)   input chunk (flattened spatial)
    o_ref   : VMEM (NB, 1, HW)    attention map (written on the last chunk)
    sum_acc : VMEM (NB, HW) f32   running channel sum
    max_acc : VMEM (NB, HW) f32   running channel max
    """
    k = pl.program_id(1)

    @pl.when(k == 0)
    def _init():
        sum_acc[...] = jnp.zeros_like(sum_acc)
        max_acc[...] = jnp.full_like(max_acc, -jnp.inf)

    # Upcast once, reuse for both reductions (v5e has no bf16 VALU anyway).
    xf = x_ref[...].astype(jnp.float32)                      # (NB, CB, HW)
    # Cross-sublane reduces go to the XLU; the kernel is HBM-bound so this is
    # hidden under the stream.  (If a bundle dump ever shows XLU binding,
    # swap the sum for an unrolled row-add loop on the VALU.)
    sum_acc[...] += jnp.sum(xf, axis=1)
    max_acc[...] = jnp.maximum(max_acc[...], jnp.max(xf, axis=1))

    @pl.when(k == pl.num_programs(1) - 1)
    def _finalize():
        NB, _, HW = x_ref.shape
        avg = sum_acc[...] * (1.0 / C)                       # (NB, HW) f32
        mx = max_acc[...]                                    # (NB, HW) f32

        # Border masks from a flat-index iota (row = idx // W, col = idx % W).
        idx = lax.broadcasted_iota(jnp.int32, (NB, HW), 1)
        col = idx % W
        row_ok = {-1: idx >= W, 0: None, 1: idx < (H - 1) * W}
        col_ok = {-1: col >= 1, 0: None, 1: col <= W - 2}

        # Hoist the 18 conv weights (scalar SMEM reads) out of the tap loop.
        w_avg = [[w_ref[ki * 3 + kj] for kj in range(3)] for ki in range(3)]
        w_max = [[w_ref[9 + ki * 3 + kj] for kj in range(3)] for ki in range(3)]

        # 3x3 conv, padding=1: out[p] += w[ki,kj] * in[p + (ki-1)*W + (kj-1)]
        # with out-of-image taps masked to zero.  Shifts are lane rolls (XLU).
        acc = jnp.zeros((NB, HW), jnp.float32)
        for ki in range(3):
            si = ki - 1
            for kj in range(3):
                sj = kj - 1
                shift = si * W + sj
                if shift == 0:
                    a_t, m_t = avg, mx
                else:
                    amt = (-shift) % HW          # roll(x, a)[p] == x[p - a]
                    a_t = pltpu.roll(avg, amt, axis=1)
                    m_t = pltpu.roll(mx, amt, axis=1)
                tap = w_avg[ki][kj] * a_t + w_max[ki][kj] * m_t
                mask = row_ok[si]
                if mask is None:
                    mask = col_ok[sj]
                elif col_ok[sj] is not None:
                    mask = mask & col_ok[sj]
                if mask is not None:
                    tap = jnp.where(mask, tap, 0.0)
                acc = acc + tap

        o_ref[:, 0, :] = jax.nn.sigmoid(acc).astype(o_ref.dtype)


def _choose_block(N, C, HW, itemsize, max_block_bytes):
    """Pick (nb, cb): batch elements and channel chunk per grid step."""
    # Sublane packing unit: 8 for 32-bit, 16 for bf16, 32 for int8.
    pack = max(8, 32 // itemsize)
    cb_cands = [c for c in range(pack, C + 1, pack) if C % c == 0] or [C]
    nb_cands = [d for d in range(1, N + 1) if N % d == 0]
    if N >= 2:
        # Keep >= 2 iterations on the parallel batch axis so v7x megacore
        # (2 TensorCores/chip) can shard it.  Harmless on 1-TC chips: cb can
        # absorb the block-size budget instead.
        nb_cands = [d for d in nb_cands if N // d >= 2] or [1]

    best = None
    for nb in nb_cands:
        for cb in cb_cands:
            b = nb * cb * HW * itemsize
            if b > max_block_bytes:
                continue
            # Prefer: biggest block (fewer, fatter DMAs), then nb a multiple
            # of 8 (accumulator sublane occupancy), then growing cb first.
            score = (b, 1 if nb % 8 == 0 else 0, cb, nb)
            if best is None or score > best[0]:
                best = (score, nb, cb)
    if best is None:
        # Even the smallest legal block exceeds the budget (huge H*W).
        # TODO(synk): tile H*W with a 1-row halo instead of over-sizing.
        return min(nb_cands), min(cb_cands)
    return best[1], best[2]


def spatial_attention(x, weight, *, max_block_bytes=None):
    """x: (N, C, H, W); weight: (1, 2, 3, 3) Conv2d(2, 1, 3, bias=False) weight."""
    N, C, H, W = x.shape
    HW = H * W
    itemsize = x.dtype.itemsize

    # Chip-aware budgets: v7x has only 64 MiB VMEM per TC, v5e/v6e have 128.
    try:
        info = pltpu.get_tpu_info()
        vmem_cap = int(getattr(info, "vmem_capacity_bytes", 64 * 1024 * 1024))
    except Exception:
        vmem_cap = 64 * 1024 * 1024          # conservative (v7x-sized) fallback
    big_vmem = vmem_cap >= 100 * 1024 * 1024
    if max_block_bytes is None:
        max_block_bytes = (16 if big_vmem else 8) * 1024 * 1024
    vmem_limit = (96 if big_vmem else 44) * 1024 * 1024

    w_flat = weight.astype(jnp.float32).reshape(18)    # [in_ch, kh, kw] flat
    x_flat = x.reshape(N, C, HW)                       # lane-dense spatial

    nb, cb = _choose_block(N, C, HW, itemsize, max_block_bytes)

    # Guard against the over-budget fallback: make sure the compiler limit at
    # least covers the double-buffered block plus accumulators.
    block_bytes = nb * cb * HW * itemsize
    if block_bytes > max_block_bytes:
        need = 3 * block_bytes + 4 * 1024 * 1024
        vmem_limit = min(max(vmem_limit, need), vmem_cap - 8 * 1024 * 1024)

    kernel = functools.partial(_spatial_attn_kernel, H=H, W=W, C=C)
    out_flat = pl.pallas_call(
        kernel,
        out_shape=jax.ShapeDtypeStruct((N, 1, HW), x.dtype),
        grid=(N // nb, C // cb),
        in_specs=[
            pl.BlockSpec(memory_space=pltpu.MemorySpace.SMEM),        # weights
            pl.BlockSpec((nb, cb, HW), lambda n, k: (n, k, 0)),       # x chunk
        ],
        out_specs=pl.BlockSpec((nb, 1, HW), lambda n, k: (n, 0, 0)),
        scratch_shapes=[
            pltpu.VMEM((nb, HW), jnp.float32),   # running channel sum
            pltpu.VMEM((nb, HW), jnp.float32),   # running channel max
        ],
        compiler_params=pltpu.CompilerParams(
            dimension_semantics=("parallel", "arbitrary"),
            vmem_limit_bytes=vmem_limit,
        ),
    )(w_flat, x_flat)

    return out_flat.reshape(N, 1, H, W)


def _reference(x, weight):
    """Pure-JAX reference matching the PyTorch forward."""
    avg = jnp.mean(x, axis=1, keepdims=True)
    mx = jnp.max(x, axis=1, keepdims=True)
    cat = jnp.concatenate([avg, mx], axis=1)                     # (N, 2, H, W)
    y = lax.conv_general_dilated(
        cat.astype(jnp.float32), weight.astype(jnp.float32),
        window_strides=(1, 1), padding=((1, 1), (1, 1)),
        dimension_numbers=("NCHW", "OIHW", "NCHW"))
    return jax.nn.sigmoid(y)


if __name__ == "__main__":
    key = jax.random.PRNGKey(0)
    kx, kw = jax.random.split(key)

    N, C, H, W = 4, 16, 16, 16
    x = jax.random.normal(kx, (N, C, H, W), dtype=jnp.float32)
    # Deterministic conv weight: nn.Conv2d(2, 1, 3, bias=False) -> (1, 2, 3, 3)
    weight = 0.1 * jax.random.normal(kw, (1, 2, 3, 3), dtype=jnp.float32)

    ref = _reference(x, weight)

    # 1) Default (chip-derived) block budget: exercises the large-block path.
    out_big = jax.block_until_ready(spatial_attention(x, weight))
    assert out_big.shape == (N, 1, H, W), out_big.shape
    err_big = float(jnp.max(jnp.abs(out_big - ref)))
    assert jnp.allclose(out_big, ref, atol=1e-5, rtol=1e-5), err_big

    # 2) Tiny block budget: forces a multi-step grid (several channel chunks),
    #    exercising the streamed-reduction init/finalize path.
    out_small = jax.block_until_ready(
        spatial_attention(x, weight, max_block_bytes=8 * 1024))
    err_small = float(jnp.max(jnp.abs(out_small - ref)))
    assert jnp.allclose(out_small, ref, atol=1e-5, rtol=1e-5), err_small

    print("KERNEL_OK")
</pallas_src>

<mosaic_0001>
module attributes {stable_mosaic.version = 11 : i64} {
  func.func @_spatial_attn_kernel(%arg0: i32, %arg1: i32, %arg2: memref<18xf32, #tpu.memory_space<smem>>, %arg3: memref<2x16x256xf32, #tpu.memory_space<vmem>>, %arg4: memref<2x1x256xf32, #tpu.memory_space<vmem>>, %arg5: memref<2x256xf32, #tpu.memory_space<vmem>>, %arg6: memref<2x256xf32, #tpu.memory_space<vmem>>) attributes {dimension_semantics = [#tpu.dimension_semantics<parallel>, #tpu.dimension_semantics<arbitrary>], iteration_bounds = array<i64: 2, 1>, scalar_prefetch = 0 : i64, scratch_operands = 2 : i64, tpu.core_type = #tpu.core_type<tc>, window_params = [{transform_indices = @transform_0, window_bounds = array<i64: 18>}, {transform_indices = @transform_1, window_bounds = array<i64: 2, 16, 256>}, {transform_indices = @transform_2, window_bounds = array<i64: 2, 1, 256>}]} {
    %c0_i32 = arith.constant 0 : i32
    %0 = arith.cmpi eq, %arg1, %c0_i32 : i32
    %1 = arith.extui %0 : i1 to i32
    %c0_i32_0 = arith.constant 0 : i32
    %2 = arith.cmpi ne, %1, %c0_i32_0 : i32
    scf.if %2 {
      %cst_14 = arith.constant 0.000000e+00 : f32
      %15 = vector.broadcast %cst_14 : f32 to vector<2x256xf32>
      %c0_15 = arith.constant 0 : index
      %c0_16 = arith.constant 0 : index
      %16 = vector.load %arg5[%c0_15, %c0_16] : memref<2x256xf32, #tpu.memory_space<vmem>>, vector<2x256xf32>
      tpu.vector_store %arg5[%c0_15, %c0_16], %15 {strides = array<i32>} : memref<2x256xf32, #tpu.memory_space<vmem>>, vector<2x256xf32>,
      %cst_17 = arith.constant 0xFF800000 : f32
      %17 = vector.broadcast %cst_17 : f32 to vector<2x256xf32>
      %c0_18 = arith.constant 0 : index
      %c0_19 = arith.constant 0 : index
      %18 = vector.load %arg6[%c0_18, %c0_19] : memref<2x256xf32, #tpu.memory_space<vmem>>, vector<2x256xf32>
      tpu.vector_store %arg6[%c0_18, %c0_19], %17 {strides = array<i32>} : memref<2x256xf32, #tpu.memory_space<vmem>>, vector<2x256xf32>,
    } else {
    }
    %c0 = arith.constant 0 : index
    %c0_1 = arith.constant 0 : index
    %c0_2 = arith.constant 0 : index
    %3 = vector.load %arg3[%c0, %c0_1, %c0_2] : memref<2x16x256xf32, #tpu.memory_space<vmem>>, vector<2x16x256xf32>
    %c0_3 = arith.constant 0 : index
    %c0_4 = arith.constant 0 : index
    %4 = vector.load %arg5[%c0_3, %c0_4] : memref<2x256xf32, #tpu.memory_space<vmem>>, vector<2x256xf32>
    %cst = arith.constant dense<0.000000e+00> : vector<2x256xf32>
    %5 = vector.multi_reduction <add>, %3, %cst [1] : vector<2x16x256xf32> to vector<2x256xf32>
    %6 = arith.addf %4, %5 : vector<2x256xf32>
    %c0_5 = arith.constant 0 : index
    %c0_6 = arith.constant 0 : index
    %7 = vector.load %arg5[%c0_5, %c0_6] : memref<2x256xf32, #tpu.memory_space<vmem>>, vector<2x256xf32>
    tpu.vector_store %arg5[%c0_5, %c0_6], %6 {strides = array<i32>} : memref<2x256xf32, #tpu.memory_space<vmem>>, vector<2x256xf32>,
    %c0_7 = arith.constant 0 : index
    %c0_8 = arith.constant 0 : index
    %8 = vector.load %arg6[%c0_7, %c0_8] : memref<2x256xf32, #tpu.memory_space<vmem>>, vector<2x256xf32>
    %cst_9 = arith.constant dense<0xFF800000> : vector<2x256xf32>
    %9 = vector.multi_reduction <maximumf>, %3, %cst_9 [1] : vector<2x16x256xf32> to vector<2x256xf32>
    %10 = arith.maximumf %8, %9 : vector<2x256xf32>
    %c0_10 = arith.constant 0 : index
    %c0_11 = arith.constant 0 : index
    %11 = vector.load %arg6[%c0_10, %c0_11] : memref<2x256xf32, #tpu.memory_space<vmem>>, vector<2x256xf32>
    tpu.vector_store %arg6[%c0_10, %c0_11], %10 {strides = array<i32>} : memref<2x256xf32, #tpu.memory_space<vmem>>, vector<2x256xf32>,
    %c0_i32_12 = arith.constant 0 : i32
    %12 = arith.cmpi eq, %arg1, %c0_i32_12 : i32
    %13 = arith.extui %12 : i1 to i32
    %c0_i32_13 = arith.constant 0 : i32
    %14 = arith.cmpi ne, %13, %c0_i32_13 : i32
    scf.if %14 {
      %c0_14 = arith.constant 0 : index
      %c0_15 = arith.constant 0 : index
      %15 = vector.load %arg5[%c0_14, %c0_15] : memref<2x256xf32, #tpu.memory_space<vmem>>, vector<2x256xf32>
      %cst_16 = arith.constant 6.250000e-02 : f32
      %16 = vector.broadcast %cst_16 : f32 to vector<2x256xf32>
      %17 = arith.mulf %15, %16 : vector<2x256xf32>
      %c0_17 = arith.constant 0 : index
      %c0_18 = arith.constant 0 : index
      %18 = vector.load %arg6[%c0_17, %c0_18] : memref<2x256xf32, #tpu.memory_space<vmem>>, vector<2x256xf32>
      %19 = tpu.iota {dimensions = array<i32: 1>} : vector<2x256xi32>
      %c16_i32 = arith.constant 16 : i32
      %c0_i32_19 = arith.constant 0 : i32
      %20 = arith.cmpi eq, %c16_i32, %c0_i32_19 : i32
      %c1_i32 = arith.constant 1 : i32
      %21 = arith.select %20, %c1_i32, %c16_i32 : i32
      %22 = vector.broadcast %21 : i32 to vector<2x256xi32>
      %23 = arith.remsi %19, %22 : vector<2x256xi32>
      %c0_i32_20 = arith.constant 0 : i32
      %24 = vector.broadcast %c0_i32_20 : i32 to vector<2x256xi32>
      %25 = arith.cmpi ne, %23, %24 : vector<2x256xi32>
      %c0_i32_21 = arith.constant 0 : i32
      %26 = vector.broadcast %c0_i32_21 : i32 to vector<2x256xi32>
      %27 = arith.cmpi slt, %23, %26 : vector<2x256xi32>
      %c0_i32_22 = arith.constant 0 : i32
      %28 = arith.cmpi slt, %21, %c0_i32_22 : i32
      %29 = vector.broadcast %28 : i1 to vector<2x256xi1>
      %30 = vector.broadcast %29 : vector<2x256xi1> to vector<2x256xi1>
      %31 = arith.xori %27, %30 : vector<2x256xi1>
      %32 = arith.andi %31, %25 : vector<2x256xi1>
      %33 = vector.broadcast %21 : i32 to vector<2x256xi32>
      %34 = arith.addi %23, %33 : vector<2x256xi32>
      %35 = arith.select %32, %34, %23 : vector<2x256xi1>, vector<2x256xi32>
      %c16_i32_23 = arith.constant 16 : i32
      %36 = vector.broadcast %c16_i32_23 : i32 to vector<2x256xi32>
      %37 = arith.cmpi sge, %19, %36 : vector<2x256xi32>
      %c240_i32 = arith.constant 240 : i32
      %38 = vector.broadcast %c240_i32 : i32 to vector<2x256xi32>
      %39 = arith.cmpi slt, %19, %38 : vector<2x256xi32>
      %c1_i32_24 = arith.constant 1 : i32
      %40 = vector.broadcast %c1_i32_24 : i32 to vector<2x256xi32>
      %41 = arith.cmpi sge, %35, %40 : vector<2x256xi32>
      %c14_i32 = arith.constant 14 : i32
      %42 = vector.broadcast %c14_i32 : i32 to vector<2x256xi32>
      %43 = arith.cmpi sle, %35, %42 : vector<2x256xi32>
      %c0_25 = arith.constant 0 : index
      %44 = memref.load %arg2[%c0_25] : memref<18xf32, #tpu.memory_space<smem>>
      %c1 = arith.constant 1 : index
      %45 = memref.load %arg2[%c1] : memref<18xf32, #tpu.memory_space<smem>>
      %c2 = arith.constant 2 : index
      %46 = memref.load %arg2[%c2] : memref<18xf32, #tpu.memory_space<smem>>
      %c3 = arith.constant 3 : index
      %47 = memref.load %arg2[%c3] : memref<18xf32, #tpu.memory_space<smem>>
      %c4 = arith.constant 4 : index
      %48 = memref.load %arg2[%c4] : memref<18xf32, #tpu.memory_space<smem>>
      %c5 = arith.constant 5 : index
      %49 = memref.load %arg2[%c5] : memref<18xf32, #tpu.memory_space<smem>>
      %c6 = arith.constant 6 : index
      %50 = memref.load %arg2[%c6] : memref<18xf32, #tpu.memory_space<smem>>
      %c7 = arith.constant 7 : index
      %51 = memref.load %arg2[%c7] : memref<18xf32, #tpu.memory_space<smem>>
      %c8 = arith.constant 8 : index
      %52 = memref.load %arg2[%c8] : memref<18xf32, #tpu.memory_space<smem>>
      %c9 = arith.constant 9 : index
      %53 = memref.load %arg2[%c9] : memref<18xf32, #tpu.memory_space<smem>>
      %c10 = arith.constant 10 : index
      %54 = memref.load %arg2[%c10] : memref<18xf32, #tpu.memory_space<smem>>
      %c11 = arith.constant 11 : index
      %55 = memref.load %arg2[%c11] : memref<18xf32, #tpu.memory_space<smem>>
      %c12 = arith.constant 12 : index
      %56 = memref.load %arg2[%c12] : memref<18xf32, #tpu.memory_space<smem>>
      %c13 = arith.constant 13 : index
      %57 = memref.load %arg2[%c13] : memref<18xf32, #tpu.memory_space<smem>>
      %c14 = arith.constant 14 : index
      %58 = memref.load %arg2[%c14] : memref<18xf32, #tpu.memory_space<smem>>
      %c15 = arith.constant 15 : index
      %59 = memref.load %arg2[%c15] : memref<18xf32, #tpu.memory_space<smem>>
      %c16 = arith.constant 16 : index
      %60 = memref.load %arg2[%c16] : memref<18xf32, #tpu.memory_space<smem>>
      %c17 = arith.constant 17 : index
      %61 = memref.load %arg2[%c17] : memref<18xf32, #tpu.memory_space<smem>>
      %cst_26 = arith.constant 0.000000e+00 : f32
      %62 = vector.broadcast %cst_26 : f32 to vector<2x256xf32>
      %c17_i32 = arith.constant 17 : i32
      %63 = tpu.dynamic_rotate %17 by %c17_i32 dim 1 : vector<2x256xf32>, i32 -> vector<2x256xf32>
      %c17_i32_27 = arith.constant 17 : i32
      %64 = tpu.dynamic_rotate %18 by %c17_i32_27 dim 1 : vector<2x256xf32>, i32 -> vector<2x256xf32>
      %65 = vector.broadcast %44 : f32 to vector<2x256xf32>
      %66 = arith.mulf %65, %63 : vector<2x256xf32>
      %67 = vector.broadcast %53 : f32 to vector<2x256xf32>
      %68 = arith.mulf %67, %64 : vector<2x256xf32>
      %69 = arith.addf %66, %68 : vector<2x256xf32>
      %70 = arith.andi %37, %41 : vector<2x256xi1>
      %cst_28 = arith.constant 0.000000e+00 : f32
      %71 = vector.broadcast %cst_28 : f32 to vector<2x256xf32>
      %72 = arith.select %70, %69, %71 : vector<2x256xi1>, vector<2x256xf32>
      %73 = arith.addf %62, %72 : vector<2x256xf32>
      %c16_i32_29 = arith.constant 16 : i32
      %74 = tpu.dynamic_rotate %17 by %c16_i32_29 dim 1 : vector<2x256xf32>, i32 -> vector<2x256xf32>
      %c16_i32_30 = arith.constant 16 : i32
      %75 = tpu.dynamic_rotate %18 by %c16_i32_30 dim 1 : vector<2x256xf32>, i32 -> vector<2x256xf32>
      %76 = vector.broadcast %45 : f32 to vector<2x256xf32>
      %77 = arith.mulf %76, %74 : vector<2x256xf32>
      %78 = vector.broadcast %54 : f32 to vector<2x256xf32>
      %79 = arith.mulf %78, %75 : vector<2x256xf32>
      %80 = arith.addf %77, %79 : vector<2x256xf32>
      %cst_31 = arith.constant 0.000000e+00 : f32
      %81 = vector.broadcast %cst_31 : f32 to vector<2x256xf32>
      %82 = arith.select %37, %80, %81 : vector<2x256xi1>, vector<2x256xf32>
      %83 = arith.addf %73, %82 : vector<2x256xf32>
      %c15_i32 = arith.constant 15 : i32
      %84 = tpu.dynamic_rotate %17 by %c15_i32 dim 1 : vector<2x256xf32>, i32 -> vector<2x256xf32>
      %c15_i32_32 = arith.constant 15 : i32
      %85 = tpu.dynamic_rotate %18 by %c15_i32_32 dim 1 : vector<2x256xf32>, i32 -> vector<2x256xf32>
      %86 = vector.broadcast %46 : f32 to vector<2x256xf32>
      %87 = arith.mulf %86, %84 : vector<2x256xf32>
      %88 = vector.broadcast %55 : f32 to vector<2x256xf32>
      %89 = arith.mulf %88, %85 : vector<2x256xf32>
      %90 = arith.addf %87, %89 : vector<2x256xf32>
      %91 = arith.andi %37, %43 : vector<2x256xi1>
      %cst_33 = arith.constant 0.000000e+00 : f32
      %92 = vector.broadcast %cst_33 : f32 to vector<2x256xf32>
      %93 = arith.select %91, %90, %92 : vector<2x256xi1>, vector<2x256xf32>
      %94 = arith.addf %83, %93 : vector<2x256xf32>
      %c1_i32_34 = arith.constant 1 : i32
      %95 = tpu.dynamic_rotate %17 by %c1_i32_34 dim 1 : vector<2x256xf32>, i32 -> vector<2x256xf32>
      %c1_i32_35 = arith.constant 1 : i32
      %96 = tpu.dynamic_rotate %18 by %c1_i32_35 dim 1 : vector<2x256xf32>, i32 -> vector<2x256xf32>
      %97 = vector.broadcast %47 : f32 to vector<2x256xf32>
      %98 = arith.mulf %97, %95 : vector<2x256xf32>
      %99 = vector.broadcast %56 : f32 to vector<2x256xf32>
      %100 = arith.mulf %99, %96 : vector<2x256xf32>
      %101 = arith.addf %98, %100 : vector<2x256xf32>
      %cst_36 = arith.constant 0.000000e+00 : f32
      %102 = vector.broadcast %cst_36 : f32 to vector<2x256xf32>
      %103 = arith.select %41, %101, %102 : vector<2x256xi1>, vector<2x256xf32>
      %104 = arith.addf %94, %103 : vector<2x256xf32>
      %105 = vector.broadcast %48 : f32 to vector<2x256xf32>
      %106 = arith.mulf %105, %17 : vector<2x256xf32>
      %107 = vector.broadcast %57 : f32 to vector<2x256xf32>
      %108 = arith.mulf %107, %18 : vector<2x256xf32>
      %109 = arith.addf %106, %108 : vector<2x256xf32>
      %110 = arith.addf %104, %109 : vector<2x256xf32>
      %c255_i32 = arith.constant 255 : i32
      %111 = tpu.dynamic_rotate %17 by %c255_i32 dim 1 : vector<2x256xf32>, i32 -> vector<2x256xf32>
      %c255_i32_37 = arith.constant 255 : i32
      %112 = tpu.dynamic_rotate %18 by %c255_i32_37 dim 1 : vector<2x256xf32>, i32 -> vector<2x256xf32>
      %113 = vector.broadcast %49 : f32 to vector<2x256xf32>
      %114 = arith.mulf %113, %111 : vector<2x256xf32>
      %115 = vector.broadcast %58 : f32 to vector<2x256xf32>
      %116 = arith.mulf %115, %112 : vector<2x256xf32>
      %117 = arith.addf %114, %116 : vector<2x256xf32>
      %cst_38 = arith.constant 0.000000e+00 : f32
      %118 = vector.broadcast %cst_38 : f32 to vector<2x256xf32>
      %119 = arith.select %43, %117, %118 : vector<2x256xi1>, vector<2x256xf32>
      %120 = arith.addf %110, %119 : vector<2x256xf32>
      %c241_i32 = arith.constant 241 : i32
      %121 = tpu.dynamic_rotate %17 by %c241_i32 dim 1 : vector<2x256xf32>, i32 -> vector<2x256xf32>
      %c241_i32_39 = arith.constant 241 : i32
      %122 = tpu.dynamic_rotate %18 by %c241_i32_39 dim 1 : vector<2x256xf32>, i32 -> vector<2x256xf32>
      %123 = vector.broadcast %50 : f32 to vector<2x256xf32>
      %124 = arith.mulf %123, %121 : vector<2x256xf32>
      %125 = vector.broadcast %59 : f32 to vector<2x256xf32>
      %126 = arith.mulf %125, %122 : vector<2x256xf32>
      %127 = arith.addf %124, %126 : vector<2x256xf32>
      %128 = arith.andi %39, %41 : vector<2x256xi1>
      %cst_40 = arith.constant 0.000000e+00 : f32
      %129 = vector.broadcast %cst_40 : f32 to vector<2x256xf32>
      %130 = arith.select %128, %127, %129 : vector<2x256xi1>, vector<2x256xf32>
      %131 = arith.addf %120, %130 : vector<2x256xf32>
      %c240_i32_41 = arith.constant 240 : i32
      %132 = tpu.dynamic_rotate %17 by %c240_i32_41 dim 1 : vector<2x256xf32>, i32 -> vector<2x256xf32>
      %c240_i32_42 = arith.constant 240 : i32
      %133 = tpu.dynamic_rotate %18 by %c240_i32_42 dim 1 : vector<2x256xf32>, i32 -> vector<2x256xf32>
      %134 = vector.broadcast %51 : f32 to vector<2x256xf32>
      %135 = arith.mulf %134, %132 : vector<2x256xf32>
      %136 = vector.broadcast %60 : f32 to vector<2x256xf32>
      %137 = arith.mulf %136, %133 : vector<2x256xf32>
      %138 = arith.addf %135, %137 : vector<2x256xf32>
      %cst_43 = arith.constant 0.000000e+00 : f32
      %139 = vector.broadcast %cst_43 : f32 to vector<2x256xf32>
      %140 = arith.select %39, %138, %139 : vector<2x256xi1>, vector<2x256xf32>
      %141 = arith.addf %131, %140 : vector<2x256xf32>
      %c239_i32 = arith.constant 239 : i32
      %142 = tpu.dynamic_rotate %17 by %c239_i32 dim 1 : vector<2x256xf32>, i32 -> vector<2x256xf32>
      %c239_i32_44 = arith.constant 239 : i32
      %143 = tpu.dynamic_rotate %18 by %c239_i32_44 dim 1 : vector<2x256xf32>, i32 -> vector<2x256xf32>
      %144 = vector.broadcast %52 : f32 to vector<2x256xf32>
      %145 = arith.mulf %144, %142 : vector<2x256xf32>
      %146 = vector.broadcast %61 : f32 to vector<2x256xf32>
      %147 = arith.mulf %146, %143 : vector<2x256xf32>
      %148 = arith.addf %145, %147 : vector<2x256xf32>
      %149 = arith.andi %39, %43 : vector<2x256xi1>
      %cst_45 = arith.constant 0.000000e+00 : f32
      %150 = vector.broadcast %cst_45 : f32 to vector<2x256xf32>
      %151 = arith.select %149, %148, %150 : vector<2x256xi1>, vector<2x256xf32>
      %152 = arith.addf %141, %151 : vector<2x256xf32>
      %153 = arith.negf %152 : vector<2x256xf32>
      %154 = math.exp %153 : vector<2x256xf32>
      %cst_46 = arith.constant 1.000000e+00 : f32
      %155 = vector.broadcast %cst_46 : f32 to vector<2x256xf32>
      %156 = arith.addf %155, %154 : vector<2x256xf32>
      %157 = arith.divf %155, %156 : vector<2x256xf32>
      %c0_47 = arith.constant 0 : index
      %c0_48 = arith.constant 0 : index
      %c0_49 = arith.constant 0 : index
      %158 = vector.load %arg4[%c0_47, %c0_48, %c0_49] : memref<2x1x256xf32, #tpu.memory_space<vmem>>, vector<2x1x256xf32>
      %159 = vector.shape_cast %158 : vector<2x1x256xf32> to vector<2x256xf32>
      %160 = vector.shape_cast %157 : vector<2x256xf32> to vector<2x1x256xf32>
      tpu.vector_store %arg4[%c0_47, %c0_48, %c0_49], %160 {strides = array<i32>} : memref<2x1x256xf32, #tpu.memory_space<vmem>>, vector<2x1x256xf32>,
    } else {
    }
    return
  }
  func.func @transform_0(%arg0: i32, %arg1: i32) -> i32 {
    %c0_i32 = arith.constant 0 : i32
    %c0_i32_0 = arith.constant 0 : i32
    return %c0_i32 : i32
  }
  func.func @transform_1(%arg0: i32, %arg1: i32) -> (i32, i32, i32) {
    %c0_i32 = arith.constant 0 : i32
    %c0_i32_0 = arith.constant 0 : i32
    return %arg0, %arg1, %c0_i32 : i32, i32, i32
  }
  func.func @transform_2(%arg0: i32, %arg1: i32) -> (i32, i32, i32) {
    %c0_i32 = arith.constant 0 : i32
    %c0_i32_0 = arith.constant 0 : i32
    %c0_i32_1 = arith.constant 0 : i32
    return %arg0, %c0_i32, %c0_i32_0 : i32, i32, i32
  }
}

</mosaic_0001>

<llo_original>
// kernel: tpu_custom_call.1
$region0: #{tpu_custom_call.1}
  #allocation0 [shape = 'u32[]', space=smem, size = 0x4, offset = 0x4, fixed_abs, tag = 'smem constant byte address 0x4 - core index']
  #allocation1 [shape = 'u32[144,128]{1,0:T(1,128)}', space=vmem, size = 0x12000, scoped, tag = 'internal scratch']
  #allocation2 [shape = 'f32[2,256]{1,0:T(2,128)}', space=vmem, size = 0x800, scoped, tag = 'scratch operand']
  #allocation3 [shape = 'f32[2,256]{1,0:T(2,128)}', space=vmem, size = 0x800, scoped, tag = 'scratch operand']
  %s0 = inlined_call_operand.hbm [shape: f32[18], index: 0, kind: input, shape index: {}]
  %s1 = inlined_call_operand.hbm [shape: f32[4,16,256], index: 1, kind: input, shape index: {}]
  %s2 = inlined_call_operand.hbm [shape: f32[4,1,256], index: 2, kind: output, shape index: {}]
  %s3 = sld [smem:[#allocation0]]
  $region57: #{tpu_custom_call.1} parent=0
    _
  %s5 = ssub.s32 1, %s3
  %s6 = scalar_select 0, %s5, %s3
  $region1: #{tpu_custom_call.1} parent=0
    #allocation4 [shape = 'u8[512]{0}', space=smem, size = 0x200, scoped, tag = 'input window, operand 0, single buffered']
    #allocation5 [shape = 's32[2]{0}', space=sflag, size = 0x8, scoped, tag = 'scoped memory for tpu_custom_call.1']
    #allocation6 [shape = 's32[2]{0}', space=sflag, size = 0x8, scoped, tag = 'scoped memory for tpu_custom_call.1']
    #allocation7 [shape = 's32[2]{0}', space=sflag, size = 0x8, scoped, tag = 'scoped memory for tpu_custom_call.1']
    #allocation8 [shape = 'u8[65536]{0}', space=vmem, size = 0x10000, scoped, tag = 'input window, operand 1']
    #allocation9 [shape = 'u8[4096]{0}', space=vmem, size = 0x1000, scoped, tag = 'output window, operand 0']
    %7 = vsyncpa [#allocation7], 0
    %8 = vsyncpa [#allocation5], 0
    %s9 = scalar_lea.sflag [#allocation5], 1
    %10 = vsyncpa %s9, 0
    %11 = vsyncpa [#allocation6], 0
    %s12 = scalar_lea.sflag [#allocation6], 1
    %13 = vsyncpa %s12, 0
    loop: start=0, step=1, limit=4
    $region2: #{tpu_custom_call.1} parent=1 // loop_pre_header
      _
    $region3: #{tpu_custom_call.1} parent=1 // loop_header
      %s15 = sphi 0, %s19
      %p16 = scmp.ge.s32.totalorder %s15, 4
      %s22 = sphi 0, %s34
      %s23 = sphi 0, %s30
      %s24 = sphi 0, %s22
      %s25 = sphi 0, %s23
      %s26 = sphi 0, %s24
      %s27 = sphi 0, %s25
      %s35 = sphi 0, %s35
      %s37 = sphi 0, %s35
      %s38 = sphi 0, %s37
      %s52 = sphi 0, %s38
      %s60 = sphi 0, %s62
      %s63 = sphi 0, %s60
      %s64 = sphi 0, %s63
      %s80 = sphi 0, %s64
      %s86 = sphi 0, %s88
      %s89 = sphi 0, %s86
      %s90 = sphi 0, %s89
      %s106 = sphi 0, %s90
    $region4: #{tpu_custom_call.1} parent=1 // loop_header_branch
      %18 = sbr.rel (%p16) target = $region8
    $region5: #{tpu_custom_call.1} parent=1 // loop_body
      %s20 = ssub.s32 %s15, 1
      %s21 = ssub.s32 %s15, 2
      %s28 = sadd.s32 1, %s23
      %p29 = scmp.ge.s32.totalorder %s28, 1
      %s30 = scalar_select %p29, 0, %s28
      %s31 = sadd.s32 1, %s22
      %s32 = scalar_select %p29, %s31, %s22
      %p33 = scmp.ge.s32.totalorder %s32, 2
      %s34 = scalar_select %p33, 0, %s32
      %s36 = sadd.s32 %s35, 1
      %p39 = scmp.eq.s32.totalorder %s15, 1
      %p40 = scmp.ne.s32.totalorder %s35, %s37
      %p41 = scmp.eq.s32.totalorder %s15, 0
      %p42 = por %p40, %p41
      %p43 = scmp.ne.s32.totalorder %s35, %s37
      %p44 = scmp.eq.s32.totalorder %s20, 1
      %p45 = por %p43, %p44
      %p46 = scmp.ne.s32.totalorder %s37, %s38
      %p47 = scmp.eq.s32.totalorder %s20, 0
      %p48 = por %p46, %p47
      %p49 = scmp.ne.s32.totalorder %s37, %s38
      %p50 = scmp.eq.s32.totalorder %s21, 1
      %p51 = por %p49, %p50
      %p53 = scmp.ne.s32.totalorder %s38, %s52
      %p54 = scmp.eq.s32.totalorder %s21, 0
      %p55 = por %p53, %p54
      %s56 = ssub.s32 %s22, %s34
      %s57 = ssub.s32 %s23, %s30
      %s58 = sor.u32 %s56, %s57
      %p59 = scmp.eq.s32.totalorder %s58, 0
      %s61 = sadd.s32 %s60, 1
      %s62 = scalar_select %p59, %s60, %s61
      %p65 = pneg %p59
      %p66 = scmp.eq.s32.totalorder %s15, 1
      %p67 = por %p65, %p66
      %p68 = scmp.ne.s32.totalorder %s60, %s63
      %p69 = scmp.eq.s32.totalorder %s15, 0
      %p70 = por %p68, %p69
      %p71 = scmp.ne.s32.totalorder %s60, %s63
      %p72 = scmp.eq.s32.totalorder %s20, 1
      %p73 = por %p71, %p72
      %p74 = scmp.ne.s32.totalorder %s63, %s64
      %p75 = scmp.eq.s32.totalorder %s20, 0
      %p76 = por %p74, %p75
      %p77 = scmp.ne.s32.totalorder %s63, %s64
      %p78 = scmp.eq.s32.totalorder %s21, 1
      %p79 = por %p77, %p78
      %p81 = scmp.ne.s32.totalorder %s64, %s80
      %p82 = scmp.eq.s32.totalorder %s21, 0
      %p83 = por %p81, %p82
      %s84 = ssub.s32 %s22, %s34
      %p85 = scmp.eq.s32.totalorder %s84, 0
      %s87 = sadd.s32 %s86, 1
      %s88 = scalar_select %p85, %s86, %s87
      %p91 = pneg %p85
      %p92 = scmp.eq.s32.totalorder %s15, 1
      %p93 = por %p91, %p92
      %p94 = scmp.ne.s32.totalorder %s86, %s89
      %p95 = scmp.eq.s32.totalorder %s15, 0
      %p96 = por %p94, %p95
      %p97 = scmp.ne.s32.totalorder %s86, %s89
      %p98 = scmp.eq.s32.totalorder %s20, 1
      %p99 = por %p97, %p98
      %p100 = scmp.ne.s32.totalorder %s89, %s90
      %p101 = scmp.eq.s32.totalorder %s20, 0
      %p102 = por %p100, %p101
      %p103 = scmp.ne.s32.totalorder %s89, %s90
      %p104 = scmp.eq.s32.totalorder %s21, 1
      %p105 = por %p103, %p104
      %p107 = scmp.ne.s32.totalorder %s90, %s106
      %p108 = scmp.eq.s32.totalorder %s21, 0
      %p109 = por %p107, %p108
      %p110 = scmp.le.s32.totalorder 1, %s15
      %p111 = scmp.lt.s32.totalorder %s15, 3
      %p112 = pnand %p110, %p111
      %p113 = pneg %p112
      // Predicated region
      $region9: #{tpu_custom_call.1} parent=5 // pred_check
        _
      $region10: #{tpu_custom_call.1} parent=5 // pred_check_branch
        %115 = sbr.rel (%p112) target = $region12
      $region11: #{tpu_custom_call.1} parent=5 // pred_region
        %s116 = ssub.s32 %s15, 1
        // Predicated region
        $region13: #{tpu_custom_call.1} parent=11 // pred_check
          %p117 = pneg %p48
        $region14: #{tpu_custom_call.1} parent=11 // pred_check_branch
          %119 = sbr.rel (%p117) target = $region16
        $region15: #{tpu_custom_call.1} parent=11 // pred_region
          %s121 = ssub.s32 16, 16
          %122 = vsyncadd [#allocation7], %s121
          %125 = dma.hbm_to_smem %s0, 16, [#allocation4], [#allocation7]
        $region16: #{tpu_custom_call.1} parent=11 // pred_fallthru
          _
      $region12: #{tpu_custom_call.1} parent=5 // pred_fallthru
        _
      %p126 = scmp.lt.s32.totalorder %s15, 2
      // Predicated region
      $region17: #{tpu_custom_call.1} parent=5 // pred_check
        %p127 = pneg %p126
      $region18: #{tpu_custom_call.1} parent=5 // pred_check_branch
        %129 = sbr.rel (%p127) target = $region20
      $region19: #{tpu_custom_call.1} parent=5 // pred_region
        // Predicated region
        $region21: #{tpu_custom_call.1} parent=19 // pred_check
          %p130 = pneg %p70
        $region22: #{tpu_custom_call.1} parent=19 // pred_check_branch
          %132 = sbr.rel (%p130) target = $region24
        $region23: #{tpu_custom_call.1} parent=19 // pred_region
          %s133 = sand.u32 %s60, 1
          %s134 = scalar_lea.sflag [#allocation5], %s133
          %s135 = sand.u32 %s60, 1
          %s136 = smul.addr %s135, 64
          %s137 = scalar_lea.vmem [#allocation8], %s136
          %s138 = smul.u32 2, %s22
          %s139 = smul.u32 2, %s23
          %s141 = ssub.s32 1024, 1024
          %142 = vsyncadd %s134, %s141
          %s143 = smul.addr %s139, 2
          %s144 = smul.addr %s138, 4
          %s145 = sadd.s32 %s143, %s144
          %s146 = smul.addr %s145, 128
          %s147 = scalar_lea.hbm %s1, %s146
          %s148 = sshll.u32 %s137, 4
          %s149 = int_to_ptr.vmem [resolvable:$true] %s148
          %154 = dma.hbm_to_vmem [thread:$0]  %s147, 1024, %s149, %s134, 256, 256, 16
        $region24: #{tpu_custom_call.1} parent=19 // pred_fallthru
          _
      $region20: #{tpu_custom_call.1} parent=5 // pred_fallthru
        _
      %p155 = scmp.le.s32.totalorder 1, %s15
      %p156 = scmp.lt.s32.totalorder %s15, 3
      %p157 = pnand %p155, %p156
      %p158 = pneg %p157
      // Predicated region
      $region25: #{tpu_custom_call.1} parent=5 // pred_check
        _
      $region26: #{tpu_custom_call.1} parent=5 // pred_check_branch
        %160 = sbr.rel (%p157) target = $region28
      $region27: #{tpu_custom_call.1} parent=5 // pred_region
        %s161 = ssub.s32 %s15, 1
        // Predicated region
        $region29: #{tpu_custom_call.1} parent=27 // pred_check
          %p162 = pneg %p48
        $region30: #{tpu_custom_call.1} parent=27 // pred_check_branch
          %164 = sbr.rel (%p162) target = $region32
        $region31: #{tpu_custom_call.1} parent=27 // pred_region
          %165 = dma.done [#allocation7], 16
        $region32: #{tpu_custom_call.1} parent=27 // pred_fallthru
          _
        %s166 = sand.u32 %s63, 1
        %s167 = scalar_lea.sflag [#allocation5], %s166
        %s168 = sand.u32 %s63, 1
        %s169 = smul.addr %s168, 64
        %s170 = scalar_lea.vmem [#allocation8], %s169
        // Predicated region
        $region33: #{tpu_custom_call.1} parent=27 // pred_check
          %p171 = pneg %p76
        $region34: #{tpu_custom_call.1} parent=27 // pred_check_branch
          %173 = sbr.rel (%p171) target = $region36
        $region35: #{tpu_custom_call.1} parent=27 // pred_region
          %174 = dma.done %s167, 1024
        $region36: #{tpu_custom_call.1} parent=27 // pred_fallthru
          _
        %175 = sfence
        %p176 = pneg %p48
        %p177 = pneg %p45
        %s178 = sand.u32 %s63, 1
        %s179 = scalar_lea.sflag [#allocation5], %s178
        %s180 = sand.u32 %s63, 1
        %s181 = smul.addr %s180, 64
        %s182 = scalar_lea.vmem [#allocation8], %s181
        %p183 = pneg %p76
        %p184 = pneg %p73
        %p185 = pneg %p102
        %p186 = pneg %p99
        %s187 = sand.u32 %s89, 1
        %s188 = scalar_lea.sflag [#allocation6], %s187
        %s189 = sand.u32 %s89, 1
        %s190 = smul.addr %s189, 4
        %s191 = scalar_lea.vmem [#allocation9], %s190
        %s192 = smul.u32 2, %s24
        %s193 = smul.u32 2, %s25
        %s194 = smul.u32 2, %s24
        %p195 = scmp.eq.s32.totalorder %s25, 0
        // Predicated region
        $region37: #{tpu_custom_call.1} parent=27 // pred_check
          %p196 = pneg %p195
        $region38: #{tpu_custom_call.1} parent=27 // pred_check_branch
          %198 = sbr.rel (%p196) target = $region40
        $region39: #{tpu_custom_call.1} parent=27 // pred_region
          %199 = vst [vmem:[#allocation2] sm:$0xf] 0.0
          %200 = vst [vmem:[#allocation3] sm:$0xf] -inf
        $region40: #{tpu_custom_call.1} parent=27 // pred_fallthru
          _
        %v201 = vld [vmem:[%s170] sm:$0xff]
        %v202 = vld [vmem:[%s170 + $0x8] sm:$0xff]
        %v203 = vld [vmem:[%s170 + $0x10] sm:$0xff]
        %v204 = vld [vmem:[%s170 + $0x18] sm:$0xff]
        %v205 = vld [vmem:[%s170 + $0x20] sm:$0xff]
        %v206 = vld [vmem:[%s170 + $0x28] sm:$0xff]
        %v207 = vld [vmem:[%s170 + $0x30] sm:$0xff]
        %v208 = vld [vmem:[%s170 + $0x38] sm:$0xff]
        %v209 = vld [vmem:[#allocation2] sm:$0xf]
        %v210 = vadd.f32 %v201, %v203
        %v211 = vrot.slane %v210, 4
        %v212 = vadd.f32 %v210, %v211
        %v213 = vrot.slane %v212, 2
        %v214 = vadd.f32 %v212, %v213
        %v215 = vrot.slane %v214, 1
        %v216 = vadd.f32 %v214, %v215
        %v217 = vadd.f32 %v202, %v204
        %v218 = vrot.slane %v217, 4
        %v219 = vadd.f32 %v217, %v218
        %v220 = vrot.slane %v219, 2
        %v221 = vadd.f32 %v219, %v220
        %v222 = vrot.slane %v221, 1
        %v223 = vadd.f32 %v221, %v222
        %v224 = vadd.f32 %v205, %v207
        %v225 = vrot.slane %v224, 4
        %v226 = vadd.f32 %v224, %v225
        %v227 = vrot.slane %v226, 2
        %v228 = vadd.f32 %v226, %v227
        %v229 = vrot.slane %v228, 1
        %v230 = vadd.f32 %v228, %v229
        %v231 = vadd.f32 %v206, %v208
        %v232 = vrot.slane %v231, 4
        %v233 = vadd.f32 %v231, %v232
        %v234 = vrot.slane %v233, 2
        %v235 = vadd.f32 %v233, %v234
        %v236 = vrot.slane %v235, 1
        %v237 = vadd.f32 %v235, %v236
        %v242 = vcombine.low %v216, %v223
        %v244 = vunpack.c.l.s4 1983009808
        %v245 = vunpack.c.0.s8 %v244
        %v246 = vlaneseq
        %v247 = vshrl.u32 %v246, 7
        %v248 = vsub.s32 %v245, %v247
        %v249 = vrot.slane %v242, %v248
        %v250 = vcombine.low %v230, %v237
        %v252 = vunpack.c.l.s4 1983009808
        %v253 = vunpack.c.0.s8 %v252
        %v254 = vlaneseq
        %v255 = vshrl.u32 %v254, 7
        %v256 = vsub.s32 %v253, %v255
        %v257 = vrot.slane %v250, %v256
        %vm258 = vcmask 1044484
        %v259 = vsel %vm258, %v249, %v249
        %vm260 = vcmask 1046534
        %v261 = vsel %vm260, %v249, %v259
        %v262 = vrot.slane %v257, 7
        %vm263 = vcmask 1041409
        %v264 = vsel %vm263, %v262, %v261
        %vm265 = vcmask 1043459
        %v266 = vsel %vm265, %v262, %v264
        %vm267 = vcmask 1045509
        %v268 = vsel %vm267, %v262, %v266
        %vm269 = vcmask 1047559
        %v270 = vsel %vm269, %v262, %v268
        %v272 = vadd.f32 %v209, %v270
        %273 = vst [vmem:[#allocation2] sm:$0xf] %v272
        %v274 = vld [vmem:[#allocation3] sm:$0xf]
        %v275 = vmax.f32 %v201, %v203
        %v276 = vrot.slane %v275, 4
        %v277 = vmax.f32 %v275, %v276
        %v278 = vrot.slane %v277, 2
        %v279 = vmax.f32 %v277, %v278
        %v280 = vrot.slane %v279, 1
        %v281 = vmax.f32 %v279, %v280
        %v282 = vmax.f32 %v202, %v204
        %v283 = vrot.slane %v282, 4
        %v284 = vmax.f32 %v282, %v283
        %v285 = vrot.slane %v284, 2
        %v286 = vmax.f32 %v284, %v285
        %v287 = vrot.slane %v286, 1
        %v288 = vmax.f32 %v286, %v287
        %v289 = vmax.f32 %v205, %v207
        %v290 = vrot.slane %v289, 4
        %v291 = vmax.f32 %v289, %v290
        %v292 = vrot.slane %v291, 2
        %v293 = vmax.f32 %v291, %v292
        %v294 = vrot.slane %v293, 1
        %v295 = vmax.f32 %v293, %v294
        %v296 = vmax.f32 %v206, %v208
        %v297 = vrot.slane %v296, 4
        %v298 = vmax.f32 %v296, %v297
        %v299 = vrot.slane %v298, 2
        %v300 = vmax.f32 %v298, %v299
        %v301 = vrot.slane %v300, 1
        %v302 = vmax.f32 %v300, %v301
        %v307 = vcombine.low %v281, %v288
        %v309 = vunpack.c.l.s4 1983009808
        %v310 = vunpack.c.0.s8 %v309
        %v311 = vlaneseq
        %v312 = vshrl.u32 %v311, 7
        %v313 = vsub.s32 %v310, %v312
        %v314 = vrot.slane %v307, %v313
        %v315 = vcombine.low %v295, %v302
        %v317 = vunpack.c.l.s4 1983009808
        %v318 = vunpack.c.0.s8 %v317
        %v319 = vlaneseq
        %v320 = vshrl.u32 %v319, 7
        %v321 = vsub.s32 %v318, %v320
        %v322 = vrot.slane %v315, %v321
        %v323 = vsel %vm258, %v314, %v314
        %v324 = vsel %vm260, %v314, %v323
        %v325 = vrot.slane %v322, 7
        %v326 = vsel %vm263, %v325, %v324
        %v327 = vsel %vm265, %v325, %v326
        %v328 = vsel %vm267, %v325, %v327
        %v329 = vsel %vm269, %v325, %v328
        %v331 = vmax.f32 %v274, %v329
        %332 = vst [vmem:[#allocation3] sm:$0xf] %v331
        // Predicated region
        $region41: #{tpu_custom_call.1} parent=27 // pred_check
          %p333 = pneg %p195
        $region42: #{tpu_custom_call.1} parent=27 // pred_check_branch
          %335 = sbr.rel (%p333) target = $region44
        $region43: #{tpu_custom_call.1} parent=27 // pred_region
          %v336 = vld [vmem:[#allocation2] sm:$0xf]
          %v337 = vmul.f32 %v336, 0.0625
          %v338 = vld [vmem:[#allocation3] sm:$0xf]
          %v339 = vlaneseq
          %v340 = vand.u32 %v339, 127
          %v341 = vadd.s32 %v340, 128
          %vm342 = vcmp.lt.s32.totalorder %v340, 0
          %v343 = vsub.s32 0, %v340
          %v344 = vsel %vm342, %v343, %v340
          %v345 = vshrl.u32 %v344, 4
          %v346 = vand.u32 %v344, 15
          %v347 = vsub.s32 0, %v346
          %v348 = vsel %vm342, %v347, %v346
          %vm349 = vcmp.lt.s32.totalorder %v341, 0
          %v350 = vsub.s32 0, %v341
          %v351 = vsel %vm349, %v350, %v341
          %v352 = vshrl.u32 %v351, 4
          %v353 = vand.u32 %v351, 15
          %v354 = vsub.s32 0, %v353
          %v355 = vsel %vm349, %v354, %v353
          %vm356 = vcmp.ne.s32.totalorder %v348, 0
          %vm357 = vcmp.ne.s32.totalorder %v355, 0
          %vm358 = vcmp.lt.s32.totalorder %v348, 0
          %vm359 = vcmp.lt.s32.totalorder %v355, 0
          %vm360 = vmand %vm358, %vm356
          %vm361 = vmand %vm359, %vm357
          %v362 = vadd.s32 %v348, 16
          %v363 = vadd.s32 %v355, 16
          %v364 = vsel %vm360, %v362, %v348
          %v365 = vsel %vm361, %v363, %v355
          %vm366 = vcmp.ge.s32.totalorder %v340, 16
          %vm367 = vcmp.ge.s32.totalorder %v341, 16
          %vm368 = vcmp.lt.s32.totalorder %v340, 240
          %vm369 = vcmp.lt.s32.totalorder %v341, 240
          %vm370 = vcmp.ge.s32.totalorder %v364, 1
          %vm371 = vcmp.ge.s32.totalorder %v365, 1
          %vm372 = vcmp.le.s32.totalorder %v364, 14
          %vm373 = vcmp.le.s32.totalorder %v365, 14
          %s374 = sld [smem:[#allocation4]]
          %s375 = sld [smem:[#allocation4 + $0x1]]
          %s376 = sld [smem:[#allocation4 + $0x2]]
          %s377 = sld [smem:[#allocation4 + $0x3]]
          %s378 = sld [smem:[#allocation4 + $0x4]]
          %s379 = sld [smem:[#allocation4 + $0x5]]
          %s380 = sld [smem:[#allocation4 + $0x6]]
          %s381 = sld [smem:[#allocation4 + $0x7]]
          %s382 = sld [smem:[#allocation4 + $0x8]]
          %s383 = sld [smem:[#allocation4 + $0x9]]
          %s384 = sld [smem:[#allocation4 + $0xa]]
          %s385 = sld [smem:[#allocation4 + $0xb]]
          %s386 = sld [smem:[#allocation4 + $0xc]]
          %s387 = sld [smem:[#allocation4 + $0xd]]
          %s388 = sld [smem:[#allocation4 + $0xe]]
          %s389 = sld [smem:[#allocation4 + $0xf]]
          %s390 = sld [smem:[#allocation4 + $0x10]]
          %s391 = sld [smem:[#allocation4 + $0x11]]
          %v394 = vunpack.c.l.s4 1983009808
          %v395 = vunpack.c.0.s8 %v394
          %v396 = vlaneseq
          %v397 = vshrl.u32 %v396, 7
          %v398 = vsub.s32 %v395, %v397
          %v399 = vrot.slane %v337, %v398
          %v400 = vcombine.high %v399, %v399
          %403 = vrot.lane.b32.xlu0 %v399, 17
          %v404 = vpop.permute.xlu0 %403
          %405 = vrot.lane.b32.xlu0 %v400, 17
          %v406 = vpop.permute.xlu0 %405
          %vm407 = vcmp.lt.s32.totalorder %v340, 17
          %v408 = vsel %vm407, %v404, %v406
          %v409 = vsel %vm407, %v406, %v404
          %v412 = vunpack.c.l.s4 1983009808
          %v413 = vunpack.c.0.s8 %v412
          %v414 = vlaneseq
          %v415 = vshrl.u32 %v414, 7
          %v416 = vsub.s32 %v413, %v415
          %v417 = vrot.slane %v338, %v416
          %v418 = vcombine.high %v417, %v417
          %421 = vrot.lane.b32.xlu0 %v417, 17
          %v422 = vpop.permute.xlu0 %421
          %423 = vrot.lane.b32.xlu0 %v418, 17
          %v424 = vpop.permute.xlu0 %423
          %v425 = vsel %vm407, %v422, %v424
          %v426 = vsel %vm407, %v424, %v422
          %v427 = vstv %s374
          %v428 = vmul.f32 %v427, %v409
          %v429 = vmul.f32 %v427, %v408
          %v430 = vstv %s383
          %v431 = vmul.f32 %v430, %v426
          %v432 = vmul.f32 %v430, %v425
          %v433 = vadd.f32 %v428, %v431
          %v434 = vadd.f32 %v429, %v432
          %vm435 = vmand %vm366, %vm370
          %vm436 = vmand %vm367, %vm371
          %v437 = vsel %vm435, %v433, 0.0
          %v438 = vsel %vm436, %v434, 0.0
          %v439 = vadd.f32 %v437, 0.0
          %v440 = vadd.f32 %v438, 0.0
          %441 = vrot.lane.b32.xlu0 %v399, 16
          %v442 = vpop.permute.xlu0 %441
          %443 = vrot.lane.b32.xlu0 %v400, 16
          %v444 = vpop.permute.xlu0 %443
          %vm445 = vcmp.lt.s32.totalorder %v340, 16
          %v446 = vsel %vm445, %v442, %v444
          %v447 = vsel %vm445, %v444, %v442
          %448 = vrot.lane.b32.xlu0 %v417, 16
          %v449 = vpop.permute.xlu0 %448
          %450 = vrot.lane.b32.xlu0 %v418, 16
          %v451 = vpop.permute.xlu0 %450
          %v452 = vsel %vm445, %v449, %v451
          %v453 = vsel %vm445, %v451, %v449
          %v454 = vstv %s375
          %v455 = vmul.f32 %v454, %v447
          %v456 = vmul.f32 %v454, %v446
          %v457 = vstv %s384
          %v458 = vmul.f32 %v457, %v453
          %v459 = vmul.f32 %v457, %v452
          %v460 = vadd.f32 %v455, %v458
          %v461 = vadd.f32 %v456, %v459
          %v462 = vsel %vm366, %v460, 0.0
          %v463 = vsel %vm367, %v461, 0.0
          %v464 = vadd.f32 %v439, %v462
          %v465 = vadd.f32 %v440, %v463
          %466 = vrot.lane.b32.xlu0 %v399, 15
          %v467 = vpop.permute.xlu0 %466
          %468 = vrot.lane.b32.xlu0 %v400, 15
          %v469 = vpop.permute.xlu0 %468
          %vm470 = vcmp.lt.s32.totalorder %v340, 15
          %v471 = vsel %vm470, %v467, %v469
          %v472 = vsel %vm470, %v469, %v467
          %473 = vrot.lane.b32.xlu0 %v417, 15
          %v474 = vpop.permute.xlu0 %473
          %475 = vrot.lane.b32.xlu0 %v418, 15
          %v476 = vpop.permute.xlu0 %475
          %v477 = vsel %vm470, %v474, %v476
          %v478 = vsel %vm470, %v476, %v474
          %v479 = vstv %s376
          %v480 = vmul.f32 %v479, %v472
          %v481 = vmul.f32 %v479, %v471
          %v482 = vstv %s385
          %v483 = vmul.f32 %v482, %v478
          %v484 = vmul.f32 %v482, %v477
          %v485 = vadd.f32 %v480, %v483
          %v486 = vadd.f32 %v481, %v484
          %vm487 = vmand %vm366, %vm372
          %vm488 = vmand %vm367, %vm373
          %v489 = vsel %vm487, %v485, 0.0
          %v490 = vsel %vm488, %v486, 0.0
          %v491 = vadd.f32 %v464, %v489
          %v492 = vadd.f32 %v465, %v490
          %493 = vrot.lane.b32.xlu0 %v399, 1
          %v494 = vpop.permute.xlu0 %493
          %495 = vrot.lane.b32.xlu0 %v400, 1
          %v496 = vpop.permute.xlu0 %495
          %vm497 = vcmp.lt.s32.totalorder %v340, 1
          %v498 = vsel %vm497, %v494, %v496
          %v499 = vsel %vm497, %v496, %v494
          %500 = vrot.lane.b32.xlu0 %v417, 1
          %v501 = vpop.permute.xlu0 %500
          %502 = vrot.lane.b32.xlu0 %v418, 1
          %v503 = vpop.permute.xlu0 %502
          %v504 = vsel %vm497, %v501, %v503
          %v505 = vsel %vm497, %v503, %v501
          %v506 = vstv %s377
          %v507 = vmul.f32 %v506, %v499
          %v508 = vmul.f32 %v506, %v498
          %v509 = vstv %s386
          %v510 = vmul.f32 %v509, %v505
          %v511 = vmul.f32 %v509, %v504
          %v512 = vadd.f32 %v507, %v510
          %v513 = vadd.f32 %v508, %v511
          %v514 = vsel %vm370, %v512, 0.0
          %v515 = vsel %vm371, %v513, 0.0
          %v516 = vadd.f32 %v491, %v514
          %v517 = vadd.f32 %v492, %v515
          %v518 = vstv %s378
          %v519 = vmul.f32 %v518, %v337
          %v520 = vstv %s387
          %v521 = vmul.f32 %v520, %v338
          %v522 = vadd.f32 %v519, %v521
          %v525 = vunpack.c.l.s4 1983009808
          %v526 = vunpack.c.0.s8 %v525
          %v527 = vlaneseq
          %v528 = vshrl.u32 %v527, 7
          %v529 = vsub.s32 %v526, %v528
          %v530 = vrot.slane %v522, %v529
          %v531 = vcombine.high %v530, %v530
          %v534 = vadd.f32 %v516, %v530
          %v535 = vadd.f32 %v517, %v531
          %536 = vrot.lane.b32.xlu0 %v399, 127
          %v537 = vpop.permute.xlu0 %536
          %538 = vrot.lane.b32.xlu0 %v400, 127
          %v539 = vpop.permute.xlu0 %538
          %vm540 = vcmp.lt.s32.totalorder %v340, 127
          %v541 = vsel %vm540, %v537, %v539
          %v542 = vsel %vm540, %v539, %v537
          %543 = vrot.lane.b32.xlu0 %v417, 127
          %v544 = vpop.permute.xlu0 %543
          %545 = vrot.lane.b32.xlu0 %v418, 127
          %v546 = vpop.permute.xlu0 %545
          %v547 = vsel %vm540, %v544, %v546
          %v548 = vsel %vm540, %v546, %v544
          %v549 = vstv %s379
          %v550 = vmul.f32 %v549, %v541
          %v551 = vmul.f32 %v549, %v542
          %v552 = vstv %s388
          %v553 = vmul.f32 %v552, %v547
          %v554 = vmul.f32 %v552, %v548
          %v555 = vadd.f32 %v550, %v553
          %v556 = vadd.f32 %v551, %v554
          %v557 = vsel %vm372, %v555, 0.0
          %v558 = vsel %vm373, %v556, 0.0
          %v559 = vadd.f32 %v534, %v557
          %v560 = vadd.f32 %v535, %v558
          %561 = vrot.lane.b32.xlu0 %v399, 113
          %v562 = vpop.permute.xlu0 %561
          %563 = vrot.lane.b32.xlu0 %v400, 113
          %v564 = vpop.permute.xlu0 %563
          %vm565 = vcmp.lt.s32.totalorder %v340, 113
          %v566 = vsel %vm565, %v562, %v564
          %v567 = vsel %vm565, %v564, %v562
          %568 = vrot.lane.b32.xlu0 %v417, 113
          %v569 = vpop.permute.xlu0 %568
          %570 = vrot.lane.b32.xlu0 %v418, 113
          %v571 = vpop.permute.xlu0 %570
          %v572 = vsel %vm565, %v569, %v571
          %v573 = vsel %vm565, %v571, %v569
          %v574 = vstv %s380
          %v575 = vmul.f32 %v574, %v566
          %v576 = vmul.f32 %v574, %v567
          %v577 = vstv %s389
          %v578 = vmul.f32 %v577, %v572
          %v579 = vmul.f32 %v577, %v573
          %v580 = vadd.f32 %v575, %v578
          %v581 = vadd.f32 %v576, %v579
          %vm582 = vmand %vm368, %vm370
          %vm583 = vmand %vm369, %vm371
          %v584 = vsel %vm582, %v580, 0.0
          %v585 = vsel %vm583, %v581, 0.0
          %v586 = vadd.f32 %v559, %v584
          %v587 = vadd.f32 %v560, %v585
          %588 = vrot.lane.b32.xlu0 %v399, 112
          %v589 = vpop.permute.xlu0 %588
          %590 = vrot.lane.b32.xlu0 %v400, 112
          %v591 = vpop.permute.xlu0 %590
          %vm592 = vcmp.lt.s32.totalorder %v340, 112
          %v593 = vsel %vm592, %v589, %v591
          %v594 = vsel %vm592, %v591, %v589
          %595 = vrot.lane.b32.xlu0 %v417, 112
          %v596 = vpop.permute.xlu0 %595
          %597 = vrot.lane.b32.xlu0 %v418, 112
          %v598 = vpop.permute.xlu0 %597
          %v599 = vsel %vm592, %v596, %v598
          %v600 = vsel %vm592, %v598, %v596
          %v601 = vstv %s381
          %v602 = vmul.f32 %v601, %v593
          %v603 = vmul.f32 %v601, %v594
          %v604 = vstv %s390
          %v605 = vmul.f32 %v604, %v599
          %v606 = vmul.f32 %v604, %v600
          %v607 = vadd.f32 %v602, %v605
          %v608 = vadd.f32 %v603, %v606
          %v609 = vsel %vm368, %v607, 0.0
          %v610 = vsel %vm369, %v608, 0.0
          %v611 = vadd.f32 %v586, %v609
          %v612 = vadd.f32 %v587, %v610
          %613 = vrot.lane.b32.xlu0 %v399, 111
          %v614 = vpop.permute.xlu0 %613
          %615 = vrot.lane.b32.xlu0 %v400, 111
          %v616 = vpop.permute.xlu0 %615
          %vm617 = vcmp.lt.s32.totalorder %v340, 111
          %v618 = vsel %vm617, %v614, %v616
          %v619 = vsel %vm617, %v616, %v614
          %620 = vrot.lane.b32.xlu0 %v417, 111
          %v621 = vpop.permute.xlu0 %620
          %622 = vrot.lane.b32.xlu0 %v418, 111
          %v623 = vpop.permute.xlu0 %622
          %v624 = vsel %vm617, %v621, %v623
          %v625 = vsel %vm617, %v623, %v621
          %v626 = vstv %s382
          %v627 = vmul.f32 %v626, %v618
          %v628 = vmul.f32 %v626, %v619
          %v629 = vstv %s391
          %v630 = vmul.f32 %v629, %v624
          %v631 = vmul.f32 %v629, %v625
          %v632 = vadd.f32 %v627, %v630
          %v633 = vadd.f32 %v628, %v631
          %vm634 = vmand %vm368, %vm372
          %vm635 = vmand %vm369, %vm373
          %v636 = vsel %vm634, %v632, 0.0
          %v637 = vsel %vm635, %v633, 0.0
          %v638 = vadd.f32 %v611, %v636
          %v639 = vadd.f32 %v612, %v637
          %v640 = vxor.u32 %v638, 2147483648
          %v641 = vxor.u32 %v639, 2147483648
          %v642 = vmul.f32 %v640, 1.442695
          %v643 = vpow.pop %v642
          %v644 = vmul.f32 %v641, 1.442695
          %v645 = vpow.pop %v644
          %v646 = vadd.f32 %v643, 1.0
          %v647 = vadd.f32 %v645, 1.0
          %v648 = vrcp.pop %v646
          %v649 = vmul.f32 1.0, %v648
          %v650 = vrcp.pop %v647
          %v651 = vmul.f32 1.0, %v650
          %v654 = vcombine.low %v649, %v651
          %v656 = vunpack.c.l.s4 1966171168
          %v657 = vunpack.c.0.s8 %v656
          %v658 = vlaneseq
          %v659 = vshrl.u32 %v658, 7
          %v660 = vsub.s32 %v657, %v659
          %v661 = vrot.slane %v654, %v660
          %v662 = vcombine.high %v661, %v661
          %v664 = vunpack.c.l.s4 1966171168
          %v665 = vunpack.c.0.s8 %v664
          %v666 = vlaneseq
          %v667 = vshrl.u32 %v666, 7
          %v668 = vsub.s32 %v665, %v667
          %v669 = vrot.slane %v661, %v668
          %v671 = vunpack.c.l.s4 1966171168
          %v672 = vunpack.c.0.s8 %v671
          %v673 = vlaneseq
          %v674 = vshrl.u32 %v673, 7
          %v675 = vsub.s32 %v672, %v674
          %v676 = vrot.slane %v662, %v675
          %v679 = vlaneseq
          %vm680 = vcmp.ge.s32.totalorder %v679, 0
          %vm681 = vcmp.lt.s32.totalorder %v679, 256
          %vm682 = vmand %vm680, %vm681
          %683 = vst.msk [vmem:[%s191] sm:$0x3] %vm682, %v669
          %684 = vst.msk [vmem:[%s191 + $0x2] sm:$0x3] %vm682, %v676
        $region44: #{tpu_custom_call.1} parent=27 // pred_fallthru
          _
        %s685 = sand.u32 %s89, 1
        %s686 = scalar_lea.sflag [#allocation6], %s685
        %s687 = sand.u32 %s89, 1
        %s688 = smul.addr %s687, 4
        %s689 = scalar_lea.vmem [#allocation9], %s688
        // Predicated region
        $region45: #{tpu_custom_call.1} parent=27 // pred_check
          %p690 = pneg %p99
        $region46: #{tpu_custom_call.1} parent=27 // pred_check_branch
          %692 = sbr.rel (%p690) target = $region48
        $region47: #{tpu_custom_call.1} parent=27 // pred_region
          %s693 = smul.u32 2, %s24
          %s695 = ssub.s32 64, 64
          %696 = vsyncadd %s686, %s695
          %s697 = smul.addr %s693, 2
          %s698 = smul.addr %s697, 16
          %s699 = scalar_lea.hbm %s2, %s698
          %s700 = sshll.u32 %s689, 4
          %s701 = int_to_ptr.vmem [resolvable:$true] %s700
          %706 = dma.vmem_to_hbm [thread:$0]  %s701, 64, %s699, %s686, 32, 32, 2
        $region48: #{tpu_custom_call.1} parent=27 // pred_fallthru
          _
      $region28: #{tpu_custom_call.1} parent=5 // pred_fallthru
        _
      %p707 = scmp.le.s32.totalorder 2, %s15
      // Predicated region
      $region49: #{tpu_custom_call.1} parent=5 // pred_check
        %p708 = pneg %p707
      $region50: #{tpu_custom_call.1} parent=5 // pred_check_branch
        %710 = sbr.rel (%p708) target = $region52
      $region51: #{tpu_custom_call.1} parent=5 // pred_region
        %s711 = ssub.s32 %s15, 2
        // Predicated region
        $region53: #{tpu_custom_call.1} parent=51 // pred_check
          %p712 = pneg %p105
        $region54: #{tpu_custom_call.1} parent=51 // pred_check_branch
          %714 = sbr.rel (%p712) target = $region56
        $region55: #{tpu_custom_call.1} parent=51 // pred_region
          %s715 = sand.u32 %s90, 1
          %s716 = scalar_lea.sflag [#allocation6], %s715
          %s717 = sand.u32 %s90, 1
          %s718 = smul.addr %s717, 4
          %s719 = scalar_lea.vmem [#allocation9], %s718
          %720 = dma.done %s716, 64
        $region56: #{tpu_custom_call.1} parent=51 // pred_fallthru
          _
      $region52: #{tpu_custom_call.1} parent=5 // pred_fallthru
        _
    $region6: #{tpu_custom_call.1} parent=1 // loop_footer
      %s19 = sadd.s32 1, %s15
    $region7: #{tpu_custom_call.1} parent=1 // loop_footer_branch
      %14 = sbr.rel target = $region3
    $region8: #{tpu_custom_call.1} parent=1 // loop_exit
      _
    %721 = vsyncpa [#allocation5], 1
    %s722 = scalar_lea.sflag [#allocation5], 1
    %723 = vsyncpa %s722, 1
    %724 = vsyncpa [#allocation6], 1
    %s725 = scalar_lea.sflag [#allocation6], 1
    %726 = vsyncpa %s725, 1
    %727 = vsyncpa [#allocation7], 1
    %s728 = scalar_lea.sflag [#allocation7], 1
    %729 = vsyncpa %s728, 1

</llo_original>
